<compile_context>
chip_gen: v5e
topology: v5e:2x2
jax: 0.10.0
libtpu: 0.0.40
codegen_flags: <defaults>
</compile_context>

<pallas_src>
import jax
import jax.numpy as jnp
from jax.experimental import pallas as pl
from jax.experimental.pallas import tpu as pltpu


def _segment_embedding_kernel(seg_ref, table_ref, out_ref):
    # seg_ref:   (TM, 1)  int32 segment ids, expected in {0, 1}
    # table_ref: (2, H)   embedding table in its native dtype (VMEM-resident)
    # out_ref:   (TM, H)  output tile in the table's native dtype
    e0 = table_ref[0:1, :]              # (1, H) row 0 (kept 2-D)
    e1 = table_ref[1:2, :]              # (1, H) row 1
    # NOTE: any nonzero id selects row 1 (valid inputs are {0,1}; nn.Embedding
    # would raise for out-of-range ids instead).
    is_one = seg_ref[...] != 0          # (TM, 1)
    # Broadcast-select gather over the 2-row table -> (TM, H). Exact, native dtype.
    out_ref[...] = jnp.where(is_one, e1, e0)


def _round_up(x, m):
    return (x + m - 1) // m * m


def _default_tile_bytes():
    # ~8 MiB/buffer is fine under the 32 MiB scoped-VMEM default on v6e/v7x
    # with double buffering; stay at 4 MiB on v5-class chips (16 MiB default).
    try:
        kind = jax.devices()[0].device_kind.lower()
    except Exception:
        kind = ""
    if ("v6" in kind) or ("v7" in kind):
        return 8 << 20
    return 4 << 20


def segment_embedding(segments, table, *, max_rows_per_tile=4096,
                      max_tile_bytes=None):
    """segments: (B, S) int ids in {0,1}; table: (2, H) -> (B, S, H) in table.dtype."""
    B, S = segments.shape
    num_rows, H = table.shape
    assert num_rows == 2, "SegmentEmbedding table must have 2 rows"
    dtype = table.dtype
    itemsize = jnp.dtype(dtype).itemsize

    if max_tile_bytes is None:
        max_tile_bytes = _default_tile_bytes()

    N = B * S
    # Minimum sublane multiple for the output tile: 8 (f32) / 16 (bf16) / 32 (int8).
    sub = 8 * max(1, 4 // itemsize)

    # Per-row VMEM cost of ONE pipeline buffer:
    #   output tile row : H * itemsize bytes
    #   ids tile row    : a (tm, 1) int32 block still occupies (8,128) vregs,
    #                     i.e. ~512 B of VMEM per row despite 4 B of real data.
    bytes_per_row = H * itemsize + 512
    budget_tm = max(sub, (max_tile_bytes // bytes_per_row) // sub * sub)
    budget_tm = min(budget_tm, max_rows_per_tile)

    # v7x megacore: keep >= MIN_STEPS grid steps so both TensorCores split the
    # "parallel" row axis and both issue writeback DMAs.
    MIN_STEPS = 8
    even_tm = max(sub, _round_up(pl.cdiv(N, MIN_STEPS), sub))
    tm = max(sub, min(budget_tm, even_tm))

    # Ragged last row-block is masked by Pallas -> no row padding, no slice copy.
    grid = (pl.cdiv(N, tm),)

    seg2d = segments.reshape(N, 1).astype(jnp.int32)

    # Advisory cost hint: purely HBM-write-bound, ~1 compare+select per element.
    cost = pl.CostEstimate(
        flops=N * H,
        transcendentals=0,
        bytes_accessed=N * H * itemsize + N * 4 + 2 * H * itemsize,
    )

    out = pl.pallas_call(
        _segment_embedding_kernel,
        out_shape=jax.ShapeDtypeStruct((N, H), dtype),
        grid=grid,
        in_specs=[
            pl.BlockSpec((tm, 1), lambda i: (i, 0)),   # row tile of ids
            pl.BlockSpec((2, H), lambda i: (0, 0)),    # full table, VMEM-resident
        ],
        out_specs=pl.BlockSpec((tm, H), lambda i: (i, 0)),
        compiler_params=pltpu.CompilerParams(
            dimension_semantics=("parallel",)),
        cost_estimate=cost,
    )(seg2d, table)

    # Contiguous reshape only — no slice / dtype-convert epilogue passes.
    return out.reshape(B, S, H)


if __name__ == "__main__":
    B, S, H = 2, 8, 32

    key = jax.random.PRNGKey(0)
    k_tab, k_seg = jax.random.split(key)

    # Deterministic "init" of nn.Embedding(2, hidden_size).weight
    table = jax.random.normal(k_tab, (2, H), dtype=jnp.float32)
    # Segment ids in {0, 1}
    segments = jax.random.randint(k_seg, (B, S), 0, 2, dtype=jnp.int32)

    out = segment_embedding(segments, table)
    out = jax.block_until_ready(out)

    # Reference: plain JAX gather (== torch Embedding lookup semantics)
    ref = table[segments]
    assert out.shape == (B, S, H)
    assert out.dtype == table.dtype
    assert jnp.allclose(out, ref), "mismatch vs reference embedding lookup"

    print("KERNEL_OK")
</pallas_src>

<mosaic_0001>
module attributes {stable_mosaic.version = 11 : i64} {
  func.func @_segment_embedding_kernel(%arg0: i32, %arg1: memref<8x1xi32, #tpu.memory_space<vmem>>, %arg2: memref<2x32xf32, #tpu.memory_space<vmem>>, %arg3: memref<8x32xf32, #tpu.memory_space<vmem>>) attributes {dimension_semantics = [#tpu.dimension_semantics<parallel>], iteration_bounds = array<i64: 2>, scalar_prefetch = 0 : i64, scratch_operands = 0 : i64, tpu.core_type = #tpu.core_type<tc>, window_params = [{transform_indices = @transform_0, window_bounds = array<i64: 8, 1>}, {pipeline_mode = #tpu.pipeline_mode<synchronous>, transform_indices = @transform_1, window_bounds = array<i64: 2, 32>}, {transform_indices = @transform_2, window_bounds = array<i64: 8, 32>}]} {
    %c0 = arith.constant 0 : index
    %c0_0 = arith.constant 0 : index
    %0 = vector.load %arg2[%c0, %c0_0] : memref<2x32xf32, #tpu.memory_space<vmem>>, vector<1x32xf32>
    %c1 = arith.constant 1 : index
    %c0_1 = arith.constant 0 : index
    %1 = vector.load %arg2[%c1, %c0_1] : memref<2x32xf32, #tpu.memory_space<vmem>>, vector<1x32xf32>
    %c0_2 = arith.constant 0 : index
    %c0_3 = arith.constant 0 : index
    %2 = vector.load %arg1[%c0_2, %c0_3] : memref<8x1xi32, #tpu.memory_space<vmem>>, vector<8x1xi32>
    %c0_i32 = arith.constant 0 : i32
    %3 = vector.broadcast %c0_i32 : i32 to vector<8x1xi32>
    %4 = arith.cmpi ne, %2, %3 : vector<8x1xi32>
    %5 = vector.shape_cast %4 : vector<8x1xi1> to vector<8x1xi1>
    %6 = vector.broadcast %5 : vector<8x1xi1> to vector<8x32xi1>
    %7 = vector.shape_cast %1 : vector<1x32xf32> to vector<1x32xf32>
    %8 = vector.broadcast %7 : vector<1x32xf32> to vector<8x32xf32>
    %9 = vector.shape_cast %0 : vector<1x32xf32> to vector<1x32xf32>
    %10 = vector.broadcast %9 : vector<1x32xf32> to vector<8x32xf32>
    %11 = arith.select %6, %8, %10 : vector<8x32xi1>, vector<8x32xf32>
    %c0_4 = arith.constant 0 : index
    %c0_5 = arith.constant 0 : index
    %12 = vector.load %arg3[%c0_4, %c0_5] : memref<8x32xf32, #tpu.memory_space<vmem>>, vector<8x32xf32>
    tpu.vector_store %arg3[%c0_4, %c0_5], %11 {strides = array<i32>} : memref<8x32xf32, #tpu.memory_space<vmem>>, vector<8x32xf32>,
    return
  }
  func.func @transform_0(%arg0: i32) -> (i32, i32) {
    %c0_i32 = arith.constant 0 : i32
    %c0_i32_0 = arith.constant 0 : i32
    return %arg0, %c0_i32 : i32, i32
  }
  func.func @transform_1(%arg0: i32) -> (i32, i32) {
    %c0_i32 = arith.constant 0 : i32
    %c0_i32_0 = arith.constant 0 : i32
    %c0_i32_1 = arith.constant 0 : i32
    return %c0_i32, %c0_i32_0 : i32, i32
  }
  func.func @transform_2(%arg0: i32) -> (i32, i32) {
    %c0_i32 = arith.constant 0 : i32
    %c0_i32_0 = arith.constant 0 : i32
    return %arg0, %c0_i32 : i32, i32
  }
}

</mosaic_0001>

<llo_original>
// kernel: tpu_custom_call.1
$region0: #{tpu_custom_call.1}
  #allocation0 [shape = 'u32[]', space=smem, size = 0x4, offset = 0x4, fixed_abs, tag = 'smem constant byte address 0x4 - core index']
  #allocation1 [shape = 'u32[72,128]{1,0:T(1,128)}', space=vmem, size = 0x9000, scoped, tag = 'internal scratch']
  %s0 = inlined_call_operand.vmem [shape: s32[16,1], index: 0, kind: input, shape index: {}]
  %s1 = inlined_call_operand.vmem [shape: f32[2,32], index: 1, kind: input, shape index: {}]
  %s2 = inlined_call_operand.hbm [shape: f32[16,32], index: 2, kind: output, shape index: {}]
  %s3 = sld [smem:[#allocation0]]
  $region41: #{tpu_custom_call.1} parent=0
    _
  %s5 = ssub.s32 1, %s3
  %s6 = scalar_select 0, %s5, %s3
  $region1: #{tpu_custom_call.1} parent=0
    #allocation2 [shape = 'u8[8192]{0}', space=vmem, size = 0x2000, scoped, tag = 'output window, operand 0']
    #allocation3 [shape = 's32[2]{0}', space=sflag, size = 0x8, scoped, tag = 'scoped memory for tpu_custom_call.1']
    %7 = vsyncpa [#allocation3], 0
    %s8 = scalar_lea.sflag [#allocation3], 1
    %9 = vsyncpa %s8, 0
    loop: start=0, step=1, limit=4
    $region2: #{tpu_custom_call.1} parent=1 // loop_pre_header
      _
    $region3: #{tpu_custom_call.1} parent=1 // loop_header
      %s11 = sphi 0, %s15
      %p12 = scmp.ge.s32.totalorder %s11, 4
      %s21 = sphi 0, %s23
      %s24 = sphi 0, %s21
      %s25 = sphi 0, %s24
      %s41 = sphi 0, %s25
      %s45 = sphi 0, %s45
      %s47 = sphi 0, %s45
      %s48 = sphi 0, %s47
      %s62 = sphi 0, %s48
      %s68 = sphi 0, %s70
      %s71 = sphi 0, %s68
      %s72 = sphi 0, %s71
      %s88 = sphi 0, %s72
    $region4: #{tpu_custom_call.1} parent=1 // loop_header_branch
      %14 = sbr.rel (%p12) target = $region8
    $region5: #{tpu_custom_call.1} parent=1 // loop_body
      %s16 = ssub.s32 %s11, 1
      %s17 = ssub.s32 %s11, 2
      %s18 = sadd.s32 %s11, 1
      %s19 = ssub.s32 %s11, %s18
      %p20 = scmp.eq.s32.totalorder %s19, 0
      %s22 = sadd.s32 %s21, 1
      %s23 = scalar_select %p20, %s21, %s22
      %p26 = pneg %p20
      %p27 = scmp.eq.s32.totalorder %s11, 1
      %p28 = por %p26, %p27
      %p29 = scmp.ne.s32.totalorder %s21, %s24
      %p30 = scmp.eq.s32.totalorder %s11, 0
      %p31 = por %p29, %p30
      %p32 = scmp.ne.s32.totalorder %s21, %s24
      %p33 = scmp.eq.s32.totalorder %s16, 1
      %p34 = por %p32, %p33
      %p35 = scmp.ne.s32.totalorder %s24, %s25
      %p36 = scmp.eq.s32.totalorder %s16, 0
      %p37 = por %p35, %p36
      %p38 = scmp.ne.s32.totalorder %s24, %s25
      %p39 = scmp.eq.s32.totalorder %s17, 1
      %p40 = por %p38, %p39
      %p42 = scmp.ne.s32.totalorder %s25, %s41
      %p43 = scmp.eq.s32.totalorder %s17, 0
      %p44 = por %p42, %p43
      %s46 = sadd.s32 %s45, 1
      %p49 = scmp.eq.s32.totalorder %s11, 1
      %p50 = scmp.ne.s32.totalorder %s45, %s47
      %p51 = scmp.eq.s32.totalorder %s11, 0
      %p52 = por %p50, %p51
      %p53 = scmp.ne.s32.totalorder %s45, %s47
      %p54 = scmp.eq.s32.totalorder %s16, 1
      %p55 = por %p53, %p54
      %p56 = scmp.ne.s32.totalorder %s47, %s48
      %p57 = scmp.eq.s32.totalorder %s16, 0
      %p58 = por %p56, %p57
      %p59 = scmp.ne.s32.totalorder %s47, %s48
      %p60 = scmp.eq.s32.totalorder %s17, 1
      %p61 = por %p59, %p60
      %p63 = scmp.ne.s32.totalorder %s48, %s62
      %p64 = scmp.eq.s32.totalorder %s17, 0
      %p65 = por %p63, %p64
      %s66 = ssub.s32 %s11, %s18
      %p67 = scmp.eq.s32.totalorder %s66, 0
      %s69 = sadd.s32 %s68, 1
      %s70 = scalar_select %p67, %s68, %s69
      %p73 = pneg %p67
      %p74 = scmp.eq.s32.totalorder %s11, 1
      %p75 = por %p73, %p74
      %p76 = scmp.ne.s32.totalorder %s68, %s71
      %p77 = scmp.eq.s32.totalorder %s11, 0
      %p78 = por %p76, %p77
      %p79 = scmp.ne.s32.totalorder %s68, %s71
      %p80 = scmp.eq.s32.totalorder %s16, 1
      %p81 = por %p79, %p80
      %p82 = scmp.ne.s32.totalorder %s71, %s72
      %p83 = scmp.eq.s32.totalorder %s16, 0
      %p84 = por %p82, %p83
      %p85 = scmp.ne.s32.totalorder %s71, %s72
      %p86 = scmp.eq.s32.totalorder %s17, 1
      %p87 = por %p85, %p86
      %p89 = scmp.ne.s32.totalorder %s72, %s88
      %p90 = scmp.eq.s32.totalorder %s17, 0
      %p91 = por %p89, %p90
      %p92 = scmp.le.s32.totalorder 1, %s11
      %p93 = scmp.lt.s32.totalorder %s11, 3
      %p94 = pnand %p92, %p93
      %p95 = pneg %p94
      // Predicated region
      $region9: #{tpu_custom_call.1} parent=5 // pred_check
        _
      $region10: #{tpu_custom_call.1} parent=5 // pred_check_branch
        %97 = sbr.rel (%p94) target = $region12
      $region11: #{tpu_custom_call.1} parent=5 // pred_region
        %s98 = ssub.s32 %s11, 1
        // Predicated region
        $region13: #{tpu_custom_call.1} parent=11 // pred_check
          %p99 = pneg %p58
        $region14: #{tpu_custom_call.1} parent=11 // pred_check_branch
          %101 = sbr.rel (%p99) target = $region16
        $region15: #{tpu_custom_call.1} parent=11 // pred_region
          _
        $region16: #{tpu_custom_call.1} parent=11 // pred_fallthru
          _
      $region12: #{tpu_custom_call.1} parent=5 // pred_fallthru
        _
      %p102 = scmp.lt.s32.totalorder %s11, 2
      // Predicated region
      $region17: #{tpu_custom_call.1} parent=5 // pred_check
        %p103 = pneg %p102
      $region18: #{tpu_custom_call.1} parent=5 // pred_check_branch
        %105 = sbr.rel (%p103) target = $region20
      $region19: #{tpu_custom_call.1} parent=5 // pred_region
        // Predicated region
        $region21: #{tpu_custom_call.1} parent=19 // pred_check
          %p106 = pneg %p31
        $region22: #{tpu_custom_call.1} parent=19 // pred_check_branch
          %108 = sbr.rel (%p106) target = $region24
        $region23: #{tpu_custom_call.1} parent=19 // pred_region
          %p109 = scmp.lt.s32.totalorder %s11, 1
          %s110 = scalar_select %p109, %s11, 1
          %s111 = smul.addr %s110, 8
          %s112 = scalar_lea.vmem %s0, %s111
        $region24: #{tpu_custom_call.1} parent=19 // pred_fallthru
          _
      $region20: #{tpu_custom_call.1} parent=5 // pred_fallthru
        _
      %p113 = scmp.le.s32.totalorder 1, %s11
      %p114 = scmp.lt.s32.totalorder %s11, 3
      %p115 = pnand %p113, %p114
      %p116 = pneg %p115
      // Predicated region
      $region25: #{tpu_custom_call.1} parent=5 // pred_check
        _
      $region26: #{tpu_custom_call.1} parent=5 // pred_check_branch
        %118 = sbr.rel (%p115) target = $region28
      $region27: #{tpu_custom_call.1} parent=5 // pred_region
        %s119 = ssub.s32 %s11, 1
        %p120 = scmp.lt.s32.totalorder %s16, 1
        %s121 = scalar_select %p120, %s16, 1
        %s122 = smul.addr %s121, 8
        %s123 = scalar_lea.vmem %s0, %s122
        %p124 = pneg %p37
        %p125 = pneg %p34
        %p126 = pneg %p58
        %p127 = pneg %p55
        %p128 = pneg %p84
        %p129 = pneg %p81
        %s130 = sand.u32 %s71, 1
        %s131 = scalar_lea.sflag [#allocation3], %s130
        %s132 = sand.u32 %s71, 1
        %s133 = smul.addr %s132, 8
        %s134 = scalar_lea.vmem [#allocation2], %s133
        %p135 = scmp.lt.s32.totalorder %s16, 1
        %s136 = scalar_select %p135, %s16, 1
        %s137 = smul.addr %s136, 8
        %s138 = scalar_lea.vmem %s0, %s137
        %v139 = vld [vmem:[%s1] sm:$0x1]
        %v140 = vld [vmem:[%s1 + $0x1] sm:$0x1]
        %v141 = vld [vmem:[%s138] sm:$0xff]
        %vm142 = vcmp.ne.s32.totalorder %v141, 0
        %v143 = vsel %vm142, 1, 0
        %144 = vset.pattern.permute.xlu0 0
        %145 = vperm.xlu0 %144, %v143
        %v146 = vpop.permute.xlu0 %145
        %vm147 = vcmp.eq.s32.totalorder %v146, 1
        %v148 = vperm.slane %v140, 0
        %v149 = vperm.slane %v139, 0
        %v150 = vsel %vm147, %v148, %v149
        %vm151 = vcmask 261120
        %152 = vst.msk [vmem:[%s134] sm:$0xff] %vm151, %v150
        %s153 = sand.u32 %s71, 1
        %s154 = scalar_lea.sflag [#allocation3], %s153
        %s155 = sand.u32 %s71, 1
        %s156 = smul.addr %s155, 8
        %s157 = scalar_lea.vmem [#allocation2], %s156
        // Predicated region
        $region29: #{tpu_custom_call.1} parent=27 // pred_check
          %p158 = pneg %p81
        $region30: #{tpu_custom_call.1} parent=27 // pred_check_branch
          %160 = sbr.rel (%p158) target = $region32
        $region31: #{tpu_custom_call.1} parent=27 // pred_region
          %162 = vsyncadd %s154, 0
          %s163 = smul.addr %s16, 8
          %s164 = scalar_lea.hbm %s2, %s163
          %s166 = sshll.u32 %s157, 4
          %s167 = int_to_ptr.vmem [resolvable:$true] %s166
          %s168 = sshll.u32 %s164, 4
          %s169 = int_to_ptr.hbm [resolvable:$true] %s168
          %171 = dma.vmem_to_hbm [thread:$0]  %s167, 128, %s169, %s154
        $region32: #{tpu_custom_call.1} parent=27 // pred_fallthru
          _
      $region28: #{tpu_custom_call.1} parent=5 // pred_fallthru
        _
      %p172 = scmp.le.s32.totalorder 2, %s11
      // Predicated region
      $region33: #{tpu_custom_call.1} parent=5 // pred_check
        %p173 = pneg %p172
      $region34: #{tpu_custom_call.1} parent=5 // pred_check_branch
        %175 = sbr.rel (%p173) target = $region36
      $region35: #{tpu_custom_call.1} parent=5 // pred_region
        %s176 = ssub.s32 %s11, 2
        // Predicated region
        $region37: #{tpu_custom_call.1} parent=35 // pred_check
          %p177 = pneg %p87
        $region38: #{tpu_custom_call.1} parent=35 // pred_check_branch
          %179 = sbr.rel (%p177) target = $region40
        $region39: #{tpu_custom_call.1} parent=35 // pred_region
          %s180 = sand.u32 %s72, 1
          %s181 = scalar_lea.sflag [#allocation3], %s180
          %s182 = sand.u32 %s72, 1
          %s183 = smul.addr %s182, 8
          %s184 = scalar_lea.vmem [#allocation2], %s183
          %186 = dma.done %s181, 128
        $region40: #{tpu_custom_call.1} parent=35 // pred_fallthru
          _
      $region36: #{tpu_custom_call.1} parent=5 // pred_fallthru
        _
    $region6: #{tpu_custom_call.1} parent=1 // loop_footer
      %s15 = sadd.s32 1, %s11
    $region7: #{tpu_custom_call.1} parent=1 // loop_footer_branch
      %10 = sbr.rel target = $region3
    $region8: #{tpu_custom_call.1} parent=1 // loop_exit
      _
    %187 = vsyncpa [#allocation3], 1
    %s188 = scalar_lea.sflag [#allocation3], 1
    %189 = vsyncpa %s188, 1

</llo_original>
